<compile_context>
chip_gen: v7x
topology: tpu7x:2x2x1
jax: 0.10.0
libtpu: 0.0.40
codegen_flags: <defaults>
</compile_context>

<pallas_src>
import math

import numpy as np
import jax
import jax.numpy as jnp
from jax.experimental import pallas as pl
from jax.experimental.pallas import tpu as pltpu


def _round_up(x: int, m: int) -> int:
    return ((x + m - 1) // m) * m


def _make_kernel(g: int):
    """Kernel specialized (at trace time) on the lane-packing group size g."""

    def kernel(const_ref, time_ref, out_ref):
        # const_ref : (2 + g, LB) f32  rows = [freq | phase | expand_0 .. expand_{g-1}]
        # time_ref  : (BR, g)     f32  g packed timesteps per output row
        # out_ref   : (BR, LB)    out_dtype, LB is a multiple of 128 (lane-dense store)
        freq = const_ref[0:1, :]      # (1, LB)
        phase = const_ref[1:2, :]     # (1, LB)
        if g == 1:
            t_full = time_ref[...]    # (BR, 1) -> broadcasts along lanes
        else:
            # Exact f32 lane-expansion of the g packed timesteps using 0/1 selection rows
            # (VPU broadcast-multiply-adds; MXU deliberately avoided so t is never rounded).
            t_full = time_ref[:, 0:1] * const_ref[2:3, :]
            for j in range(1, g):     # static unrolled loop, g is small
                t_full = t_full + time_ref[:, j:j + 1] * const_ref[2 + j:3 + j, :]
        # cos(x) == sin(x + pi/2): one lane-dense store covers both halves.
        out_ref[...] = jnp.sin(t_full * freq + phase).astype(out_ref.dtype)

    return kernel


def sinusoidal_position_embeddings(time: jax.Array, dim: int, *,
                                   out_dtype=jnp.float32,
                                   target_block_bytes: int = 2 << 20) -> jax.Array:
    """Pallas equivalent of SinusoidalPositionEmbeddings(dim)(time).

    time: shape (B,), any float/int dtype (cast to float32).
    returns: (B, dim) out_dtype, layout [sin | cos] along the last axis.
    """
    assert dim % 2 == 0, "dim must be even"
    assert dim >= 4, "dim must be >= 4 (half_dim - 1 == 0 divides by zero otherwise)"
    half = dim // 2
    b = time.shape[0]

    # ---- constant tables (tiny, computed once in plain JAX) -------------------------------
    scale = math.log(10000.0) / (half - 1)
    freqs = jnp.exp(jnp.arange(half, dtype=jnp.float32) * -scale)                 # (half,)
    freq_full = jnp.concatenate([freqs, freqs])                                   # (dim,)
    phase = jnp.concatenate([jnp.zeros((half,), jnp.float32),
                             jnp.full((half,), 0.5 * math.pi, jnp.float32)])      # (dim,)

    # ---- lane packing so the output store is lane-dense (last dim multiple of 128) --------
    if dim % 128 == 0:
        g, W = 1, dim
    else:
        W = dim * 128 // math.gcd(dim, 128)        # smallest multiple of both dim and 128
        if W <= 2048:
            g = W // dim                           # batch rows packed per output row
        else:
            # TODO(synk): exotic dim — fall back to an unpacked (masked-store) layout.
            g, W = 1, dim

    freq_row = jnp.tile(freq_full, g).reshape(1, W)
    phase_row = jnp.tile(phase, g).reshape(1, W)
    if g > 1:
        # expand[j, l] = 1.0 iff lane l belongs to packed group j (l // dim == j)
        expand = jnp.repeat(jnp.eye(g, dtype=jnp.float32), dim, axis=1)           # (g, W)
        const = jnp.concatenate([freq_row, phase_row, expand], axis=0)            # (2+g, W)
    else:
        const = jnp.concatenate([freq_row, phase_row], axis=0)                    # (2, W)

    # ---- batch packing; pad only to the sublane multiple, NOT to the block size -----------
    itemsize = np.dtype(out_dtype).itemsize
    sub = max(8, 32 // itemsize)                   # 8 rows (f32), 16 rows (bf16) packing
    rows = -(-b // g)
    rows_pad = _round_up(rows, sub)
    t32 = time.astype(jnp.float32).reshape(-1)
    pad = rows_pad * g - b
    if pad:
        t32 = jnp.pad(t32, (0, pad))
    time_2d = t32.reshape(rows_pad, g)

    # ---- lane split: gives the second v7x TensorCore work even when the batch grid is 1 ---
    n_lane_blocks = 2 if (W % 256 == 0) else 1
    lane_block = W // n_lane_blocks

    # ---- block rows: ~2 MiB output block (85%+ of HBM roofline), capped by available rows.
    # Double-buffered output stays ~4 MiB of VMEM -> well under v7x's 32 MiB scoped default.
    block_rows = max(sub, _round_up(target_block_bytes // (lane_block * itemsize), sub))
    block_rows = min(block_rows, rows_pad)

    grid = (pl.cdiv(rows_pad, block_rows), n_lane_blocks)   # ragged last row-block is masked

    out = pl.pallas_call(
        _make_kernel(g),
        out_shape=jax.ShapeDtypeStruct((rows_pad, W), out_dtype),
        grid=grid,
        in_specs=[
            pl.BlockSpec((const.shape[0], lane_block), lambda i, j: (0, j)),  # merged consts
            pl.BlockSpec((block_rows, g), lambda i, j: (i, 0)),               # packed time
        ],
        out_specs=pl.BlockSpec((block_rows, lane_block), lambda i, j: (i, j)),
        compiler_params=pltpu.CompilerParams(
            dimension_semantics=("parallel", "parallel"),   # both axes shard on v7x 2 TCs
        ),
    )(const, time_2d)

    # Unpack: contiguous reshape is free; slice only when padding actually exists.
    emb = out.reshape(rows_pad * g, dim)
    if rows_pad * g != b:
        emb = emb[:b]
    return emb


def _reference(time: jax.Array, dim: int) -> jax.Array:
    half = dim // 2
    scale = math.log(10000.0) / (half - 1)
    freqs = jnp.exp(jnp.arange(half, dtype=jnp.float32) * -scale)
    emb = time.astype(jnp.float32)[:, None] * freqs[None, :]
    return jnp.concatenate([jnp.sin(emb), jnp.cos(emb)], axis=-1)


if __name__ == "__main__":
    key = jax.random.PRNGKey(0)
    # (batch, dim): exercises the packed path (dim=32 -> 4 rows/lane-row), the unpacked +
    # lane-split path (dim=256), and the ragged-batch slice path (B=5).
    checks = [(8, 32), (8, 256), (5, 32)]
    for batch, dim in checks:
        k = jax.random.fold_in(key, 1000 * dim + batch)
        time = jax.random.uniform(k, (batch,), dtype=jnp.float32) * 1000.0  # diffusion-like t
        out = jax.block_until_ready(sinusoidal_position_embeddings(time, dim))
        ref = _reference(time, dim)
        assert out.shape == (batch, dim)
        assert out.dtype == jnp.float32
        # cos computed as sin(x + pi/2): ~1e-4 abs deviation at |x| ~ 1e3 rad (documented).
        assert jnp.allclose(out, ref, atol=2e-3, rtol=1e-3), f"mismatch B={batch} dim={dim}"
    print("KERNEL_OK")
</pallas_src>

<mosaic_0001>
module attributes {stable_mosaic.version = 11 : i64} {
  func.func @kernel(%arg0: i32, %arg1: i32, %arg2: memref<6x128xf32, #tpu.memory_space<vmem>>, %arg3: memref<8x4xf32, #tpu.memory_space<vmem>>, %arg4: memref<8x128xf32, #tpu.memory_space<vmem>>) attributes {dimension_semantics = [#tpu.dimension_semantics<parallel>, #tpu.dimension_semantics<parallel>], iteration_bounds = array<i64: 1, 1>, scalar_prefetch = 0 : i64, scratch_operands = 0 : i64, tpu.core_type = #tpu.core_type<tc>, window_params = [{transform_indices = @transform_0, window_bounds = array<i64: 6, 128>}, {transform_indices = @transform_1, window_bounds = array<i64: 8, 4>}, {transform_indices = @transform_2, window_bounds = array<i64: 8, 128>}]} {
    %c0 = arith.constant 0 : index
    %c0_0 = arith.constant 0 : index
    %0 = vector.load %arg2[%c0, %c0_0] : memref<6x128xf32, #tpu.memory_space<vmem>>, vector<1x128xf32>
    %c1 = arith.constant 1 : index
    %c0_1 = arith.constant 0 : index
    %1 = vector.load %arg2[%c1, %c0_1] : memref<6x128xf32, #tpu.memory_space<vmem>>, vector<1x128xf32>
    %c0_2 = arith.constant 0 : index
    %c0_3 = arith.constant 0 : index
    %2 = vector.load %arg3[%c0_2, %c0_3] : memref<8x4xf32, #tpu.memory_space<vmem>>, vector<8x1xf32>
    %c2 = arith.constant 2 : index
    %c0_4 = arith.constant 0 : index
    %3 = vector.load %arg2[%c2, %c0_4] : memref<6x128xf32, #tpu.memory_space<vmem>>, vector<1x128xf32>
    %4 = vector.broadcast %2 : vector<8x1xf32> to vector<8x128xf32>
    %5 = vector.broadcast %3 : vector<1x128xf32> to vector<8x128xf32>
    %6 = arith.mulf %4, %5 : vector<8x128xf32>
    %c0_5 = arith.constant 0 : index
    %c1_6 = arith.constant 1 : index
    %7 = vector.load %arg3[%c0_5, %c1_6] : memref<8x4xf32, #tpu.memory_space<vmem>>, vector<8x1xf32>
    %c3 = arith.constant 3 : index
    %c0_7 = arith.constant 0 : index
    %8 = vector.load %arg2[%c3, %c0_7] : memref<6x128xf32, #tpu.memory_space<vmem>>, vector<1x128xf32>
    %9 = vector.broadcast %7 : vector<8x1xf32> to vector<8x128xf32>
    %10 = vector.broadcast %8 : vector<1x128xf32> to vector<8x128xf32>
    %11 = arith.mulf %9, %10 : vector<8x128xf32>
    %12 = arith.addf %6, %11 : vector<8x128xf32>
    %c0_8 = arith.constant 0 : index
    %c2_9 = arith.constant 2 : index
    %13 = vector.load %arg3[%c0_8, %c2_9] : memref<8x4xf32, #tpu.memory_space<vmem>>, vector<8x1xf32>
    %c4 = arith.constant 4 : index
    %c0_10 = arith.constant 0 : index
    %14 = vector.load %arg2[%c4, %c0_10] : memref<6x128xf32, #tpu.memory_space<vmem>>, vector<1x128xf32>
    %15 = vector.broadcast %13 : vector<8x1xf32> to vector<8x128xf32>
    %16 = vector.broadcast %14 : vector<1x128xf32> to vector<8x128xf32>
    %17 = arith.mulf %15, %16 : vector<8x128xf32>
    %18 = arith.addf %12, %17 : vector<8x128xf32>
    %c0_11 = arith.constant 0 : index
    %c3_12 = arith.constant 3 : index
    %19 = vector.load %arg3[%c0_11, %c3_12] : memref<8x4xf32, #tpu.memory_space<vmem>>, vector<8x1xf32>
    %c5 = arith.constant 5 : index
    %c0_13 = arith.constant 0 : index
    %20 = vector.load %arg2[%c5, %c0_13] : memref<6x128xf32, #tpu.memory_space<vmem>>, vector<1x128xf32>
    %21 = vector.broadcast %19 : vector<8x1xf32> to vector<8x128xf32>
    %22 = vector.broadcast %20 : vector<1x128xf32> to vector<8x128xf32>
    %23 = arith.mulf %21, %22 : vector<8x128xf32>
    %24 = arith.addf %18, %23 : vector<8x128xf32>
    %25 = vector.broadcast %0 : vector<1x128xf32> to vector<8x128xf32>
    %26 = arith.mulf %24, %25 : vector<8x128xf32>
    %27 = vector.broadcast %1 : vector<1x128xf32> to vector<8x128xf32>
    %28 = arith.addf %26, %27 : vector<8x128xf32>
    %29 = math.sin %28 : vector<8x128xf32>
    %c0_14 = arith.constant 0 : index
    %c0_15 = arith.constant 0 : index
    %30 = vector.load %arg4[%c0_14, %c0_15] : memref<8x128xf32, #tpu.memory_space<vmem>>, vector<8x128xf32>
    tpu.vector_store %arg4[%c0_14, %c0_15], %29 {strides = array<i32>} : memref<8x128xf32, #tpu.memory_space<vmem>>, vector<8x128xf32>,
    return
  }
  func.func @transform_0(%arg0: i32, %arg1: i32) -> (i32, i32) {
    %c0_i32 = arith.constant 0 : i32
    %c0_i32_0 = arith.constant 0 : i32
    return %c0_i32, %arg1 : i32, i32
  }
  func.func @transform_1(%arg0: i32, %arg1: i32) -> (i32, i32) {
    %c0_i32 = arith.constant 0 : i32
    %c0_i32_0 = arith.constant 0 : i32
    return %arg0, %c0_i32 : i32, i32
  }
  func.func @transform_2(%arg0: i32, %arg1: i32) -> (i32, i32) {
    %c0_i32 = arith.constant 0 : i32
    return %arg0, %arg1 : i32, i32
  }
}

</mosaic_0001>

<llo_original>
// kernel: tpu_custom_call.1
$region0: #{tpu_custom_call.1}
  #allocation0 [shape = 'u32[]', space=smem, size = 0x4, offset = 0x4, fixed_abs, tag = 'smem constant byte address 0x4 - core index']
  #allocation1 [shape = 'u32[144,128]{1,0:T(1,128)}', space=vmem, size = 0x12000, scoped, tag = 'internal scratch']
  %s0 = inlined_call_operand.vmem [shape: f32[6,128], index: 0, kind: input, shape index: {}]
  %s1 = inlined_call_operand.vmem [shape: f32[8,4], index: 1, kind: input, shape index: {}]
  %s2 = inlined_call_operand.hbm [shape: f32[8,128], index: 2, kind: output, shape index: {}]
  %s3 = sld [smem:[#allocation0]]
  $region18: #{tpu_custom_call.1} parent=0
    _
  %s5 = ssub.s32 1, %s3
  %s6 = scalar_select 0, %s5, %s3
  $region1: #{tpu_custom_call.1} parent=0
    #allocation2 [shape = 'u8[4096]{0}', space=vmem, size = 0x1000, scoped, tag = 'output window, operand 0, single buffered']
    #allocation3 [shape = 's32[1]{0}', space=sflag, size = 0x4, scoped, tag = 'scoped memory for tpu_custom_call.1']
    %7 = vsyncpa [#allocation3], 0
    // Predicated region
    $region2: #{tpu_custom_call.1} parent=1 // pred_check
      _
    $region3: #{tpu_custom_call.1} parent=1 // pred_check_branch
      %9 = sbr.rel (0) target = $region5
    $region4: #{tpu_custom_call.1} parent=1 // pred_region
      _
    $region5: #{tpu_custom_call.1} parent=1 // pred_fallthru
      _
    // Predicated region
    $region6: #{tpu_custom_call.1} parent=1 // pred_check
      _
    $region7: #{tpu_custom_call.1} parent=1 // pred_check_branch
      %11 = sbr.rel (0) target = $region9
    $region8: #{tpu_custom_call.1} parent=1 // pred_region
      _
    $region9: #{tpu_custom_call.1} parent=1 // pred_fallthru
      _
    %v12 = vld [vmem:[%s0] sm:$0x1]
    %v13 = vld [vmem:[%s0 + $0x1] sm:$0x1]
    %v14 = vld [vmem:[%s1] sm:$0xff]
    %v15 = vld [vmem:[%s0 + $0x2] sm:$0x1]
    %17 = vset.pattern.permute.xlu0 0
    %18 = vperm.xlu0 %17, %v14
    %v19 = vpop.permute.xlu0 %18
    %v21 = vlaneseq
    %v22 = vshrl.u32 %v21, 7
    %v23 = vsub.s32 0, %v22
    %v24 = vrot.slane %v15, %v23
    %v25 = vmul.f32 %v19, %v24
    %v26 = vld [vmem:[%s0 + $0x3] sm:$0x1]
    %27 = vset.pattern.permute.xlu0 1
    %28 = vperm.xlu0 %27, %v14
    %v29 = vpop.permute.xlu0 %28
    %v31 = vlaneseq
    %v32 = vshrl.u32 %v31, 7
    %v33 = vsub.s32 0, %v32
    %v34 = vrot.slane %v26, %v33
    %v35 = vmul.f32 %v29, %v34
    %v36 = vadd.f32 %v25, %v35
    %v37 = vld [vmem:[%s0 + $0x4] sm:$0x1]
    %38 = vset.pattern.permute.xlu0 2
    %39 = vperm.xlu0 %38, %v14
    %v40 = vpop.permute.xlu0 %39
    %v42 = vlaneseq
    %v43 = vshrl.u32 %v42, 7
    %v44 = vsub.s32 0, %v43
    %v45 = vrot.slane %v37, %v44
    %v46 = vmul.f32 %v40, %v45
    %v47 = vadd.f32 %v36, %v46
    %v48 = vld [vmem:[%s0 + $0x5] sm:$0x1]
    %49 = vset.pattern.permute.xlu0 3
    %50 = vperm.xlu0 %49, %v14
    %v51 = vpop.permute.xlu0 %50
    %v53 = vlaneseq
    %v54 = vshrl.u32 %v53, 7
    %v55 = vsub.s32 0, %v54
    %v56 = vrot.slane %v48, %v55
    %v57 = vmul.f32 %v51, %v56
    %v58 = vadd.f32 %v47, %v57
    %v59 = vlaneseq
    %v60 = vshrl.u32 %v59, 7
    %v61 = vsub.s32 0, %v60
    %v62 = vrot.slane %v12, %v61
    %v63 = vmul.f32 %v58, %v62
    %v64 = vlaneseq
    %v65 = vshrl.u32 %v64, 7
    %v66 = vsub.s32 0, %v65
    %v67 = vrot.slane %v13, %v66
    %v68 = vadd.f32 %v63, %v67
    %v69 = vand.u32 2147483647, %v68
    %vm70 = vcmp.le.f32.partialorder %v69, 0.7853982
    %vm71 = vcmp.lt.s32.totalorder %v68, 0
    %v72 = vand.u32 %v68, 2139095040
    %v73 = vshrl.u32 %v72, 23
    %v74 = vsub.s32 %v73, 127
    %v75 = vand.u32 2147483647, %v68
    %v76 = vand.u32 %v75, 8388607
    %v77 = vor.u32 %v76, 8388608
    %v78 = vsub.s32 0, %v77
    %v79 = vadd.s32 %v74, 1
    %vm80 = vcmp.gt.s32.totalorder %v79, 0
    %v81 = vsel %vm80, %v79, 0
    %v82 = vshrl.u32 %v81, 5
    %v83 = vand.u32 %v81, 31
    %v84 = vsub.s32 32, %v83
    %v85 = vshrl.u32 683565275, %v84
    %v86 = vshll.u32 683565275, %v83
    %v87 = vshrl.u32 2475754826, %v84
    %v88 = vor.u32 %v86, %v87
    %v89 = vshll.u32 2475754826, %v83
    %v90 = vshrl.u32 2131351028, %v84
    %v91 = vor.u32 %v89, %v90
    %v92 = vshll.u32 2131351028, %v83
    %v93 = vshrl.u32 2102212464, %v84
    %v94 = vor.u32 %v92, %v93
    %v95 = vshll.u32 2102212464, %v83
    %v96 = vshrl.u32 920167782, %v84
    %v97 = vor.u32 %v95, %v96
    %v98 = vshll.u32 920167782, %v83
    %v99 = vshrl.u32 1326507024, %v84
    %v100 = vor.u32 %v98, %v99
    %vm101 = vcmp.lt.s32.totalorder %v82, 1
    %vm102 = vcmp.lt.s32.totalorder %v82, 2
    %vm103 = vcmp.lt.s32.totalorder %v82, 3
    %vm104 = vcmp.lt.s32.totalorder %v82, 4
    %v105 = vsel %vm101, %v85, %v88
    %v106 = vsel %vm104, %v94, 2102212464
    %v107 = vsel %vm103, %v91, %v106
    %v108 = vsel %vm102, %v105, %v107
    %v109 = vsel %vm101, %v88, %v91
    %v110 = vsel %vm104, %v97, 920167782
    %v111 = vsel %vm103, %v94, %v110
    %v112 = vsel %vm102, %v109, %v111
    %v113 = vsel %vm101, %v91, %v94
    %v114 = vsel %vm104, %v100, 1326507024
    %v115 = vsel %vm103, %v97, %v114
    %v116 = vsel %vm102, %v113, %v115
    %v117 = vshll.u32 %v77, 8
    %v118 = vmul.u32.u64.compose %v117, %v116
    %v119 = vextract.low.u32 %v118
    %v120 = vextract.high.u32 %v118
    %v121 = vmul.u32.u64.compose %v117, %v112
    %v122 = vextract.low.u32 %v121
    %v123 = vextract.high.u32 %v121
    %v124 = vmul.u32 %v117, %v108
    %v125 = vadd.s32 %v120, %v122
    %vm126 = vc.u32 %v120, %v122
    %v127 = vadd.s32 %v123, 1
    %v128 = vsel %vm126, %v127, %v123
    %v129 = vadd.s32 %v124, %v128
    %v130 = vadd.s32 %v129, 536870912
    %v131 = vshrl.u32 %v130, 30
    %v132 = vshll.u32 %v131, 30
    %v133 = vsub.s32 %v129, %v132
    %vm134 = vcmp.lt.s32.totalorder %v133, 0
    %v135 = vsub.s32 0, %v133
    %v136 = vsel %vm134, %v135, %v133
    %v137 = vclz %v136
    %v138 = vsub.s32 %v137, 2
    %vm139 = vcmp.gt.s32.totalorder 0, %v138
    %v140 = vsel %vm139, 0, %v138
    %v141 = vsub.s32 32, %v140
    %v142 = vshll.u32 %v133, %v140
    %v143 = vshrl.u32 %v125, %v141
    %v144 = vor.u32 %v142, %v143
    %v145 = vsub.s32 4294967266, %v140
    %v146 = vadd.s32 %v145, 127
    %v147 = vshll.u32 %v146, 23
    %v148 = vor.u32 4788187, %v147
    %v149 = vand.u32 2147483647, %v148
    %v151 = vcvt.s32.f32 %v144
    %v152 = vmul.f32 %v151, %v149
    %v153 = vxor.u32 %v152, 2147483648
    %v154 = vsel %vm71, %v153, %v152
    %v155 = vsub.s32 4, %v131
    %v156 = vsel %vm71, %v155, %v131
    %v157 = vsel %vm70, %v68, %v154
    %v158 = vsel %vm70, 0, %v156
    %v159 = vcosq.f32.pop %v157
    %v160 = vsinq.f32.pop %v157
    %vm161 = vweird.f32 %v68
    %v162 = vadd.s32 %v158, 3
    %v163 = vand.u32 %v162, 3
    %vm164 = vcmp.lt.s32.totalorder %v163, 2
    %vm165 = vcmp.eq.s32.totalorder %v163, 0
    %v166 = vxor.u32 %v160, 2147483648
    %v167 = vsel %vm165, %v159, %v166
    %vm168 = vcmp.eq.s32.totalorder %v163, 2
    %v169 = vxor.u32 %v159, 2147483648
    %v170 = vsel %vm168, %v169, %v160
    %v171 = vsel %vm164, %v167, %v170
    %v172 = vsel %vm161, nan, %v171
    %173 = vst [vmem:[#allocation2] sm:$0xff] %v172
    // Predicated region
    $region10: #{tpu_custom_call.1} parent=1 // pred_check
      _
    $region11: #{tpu_custom_call.1} parent=1 // pred_check_branch
      %175 = sbr.rel (0) target = $region13
    $region12: #{tpu_custom_call.1} parent=1 // pred_region
      %s177 = ssub.s32 128, 128
      %178 = vsyncadd [#allocation3], %s177
      %s180 = sshll.u32 [#allocation2], 4
      %s181 = int_to_ptr.vmem [resolvable:$true] %s180
      %183 = dma.vmem_to_hbm [thread:$0]  %s181, 128, %s2, [#allocation3]
    $region13: #{tpu_custom_call.1} parent=1 // pred_fallthru
      _
    // Predicated region
    $region14: #{tpu_custom_call.1} parent=1 // pred_check
      _
    $region15: #{tpu_custom_call.1} parent=1 // pred_check_branch
      %185 = sbr.rel (0) target = $region17
    $region16: #{tpu_custom_call.1} parent=1 // pred_region
      %186 = dma.done [#allocation3], 128
    $region17: #{tpu_custom_call.1} parent=1 // pred_fallthru
      _
    %187 = vsyncpa [#allocation3], 1

</llo_original>
